<compile_context>
chip_gen: v5e
topology: v5e:2x2
jax: 0.10.0
libtpu: 0.0.40
codegen_flags: <defaults>
</compile_context>

<pallas_src>
import jax
import jax.numpy as jnp
from jax.experimental import pallas as pl
from jax.experimental.pallas import tpu as pltpu

HIDDEN = 128
# Explicit scoped-VMEM limit: valid on every generation (v5e/v6e physical VMEM
# is 128 MiB, v7x is 64 MiB) and above v5e's 16 MiB default scoped limit.
_VMEM_BUDGET = 32 << 20


def _mlp_kernel(x_ref, w1_ref, b1_ref, w2_ref, b2_ref, o_ref):
    # fc1 + ReLU: hot path on the MXU, f32 accumulation.
    h = jnp.dot(x_ref[...], w1_ref[...], preferred_element_type=jnp.float32)
    h = jnp.maximum(h + b1_ref[...], 0.0)            # b1 is [1, 128], broadcasts over rows
    # fc2 (H=128 -> 1): multiply by the single w2 column broadcast over rows (VPU)
    # and reduce along the lane axis (XLU); the reshape is a sublane->lane
    # relayout feeding a lane-dense [1, TB] store. This stays hidden under the
    # x DMA and avoids a wasteful 1-lane-wide MXU matmul.
    y = jnp.sum(h * w2_ref[...], axis=-1)            # [TB]
    o_ref[...] = (y + b2_ref[0]).reshape(1, -1).astype(o_ref.dtype)


def _round_up(n, m):
    return (n + m - 1) // m * m


def _choose_batch_tile(B, D, itemsize):
    """Pick the batch tile TB (multiple of 128 for a lane-dense output):
      * big enough that each streamed x tile is multi-MiB, so the ~0.35 us
        per-grid-step overhead is amortized (dominant loss before),
      * small enough that double-buffered x + resident weights + the fc1
        intermediate fit in half of the scoped-VMEM budget (v7x has 64 MiB),
      * leaving >=2 grid steps when B allows, so the "parallel" batch axis can
        be sharded over both TensorCores on v7x."""
    target_x_bytes = 4 << 20
    tb = max(128, min(8192, target_x_bytes // max(D * itemsize, 1)))
    tb = _round_up(tb, 128)
    tb = min(tb, _round_up(B, 128))
    if B > 128 and pl.cdiv(B, tb) < 2:
        tb = max(128, _round_up(pl.cdiv(B, 2), 128))

    def vmem_bytes(t):
        x_bytes = 2 * t * D * itemsize                    # double-buffered x tile
        w_bytes = (D * HIDDEN + 2 * HIDDEN) * itemsize    # resident w1 + b1 row + w2 row
        h_bytes = 2 * t * HIDDEN * 4                      # fc1 intermediate + ReLU/fc2 temp (f32)
        o_bytes = 2 * t * itemsize                        # double-buffered [1, t] output tile
        return x_bytes + w_bytes + h_bytes + o_bytes

    while tb > 128 and vmem_bytes(tb) > _VMEM_BUDGET // 2:
        tb -= 128
    return tb


def student_model_forward(x, w1, b1, w2, b2):
    """x: [B, D]; w1: [D, 128]; b1: [128]; w2: [128, 1]; b2: [1] -> [B, 1]."""
    B, D = x.shape
    H = w1.shape[1]
    O = w2.shape[1]
    assert H == HIDDEN and O == 1, "kernel is specialized to fc1->128, fc2->1"

    itemsize = jnp.dtype(x.dtype).itemsize
    TB = _choose_batch_tile(B, D, itemsize)
    grid = (pl.cdiv(B, TB),)        # no jnp.pad: Pallas masks the ragged last x block
    Bout = grid[0] * TB             # lane-padded output; padding lanes sliced off below

    b1_row = b1.reshape(1, H)
    w2_row = w2.reshape(1, H)       # O == 1, so transpose == reshape
    b2_vec = b2.reshape(1)

    cost = pl.CostEstimate(
        flops=2 * B * D * H + 3 * B * H,
        transcendentals=0,
        bytes_accessed=(B * D + D * H + 2 * H + 1 + B) * itemsize,
    )

    # Note: the kernel is HBM-bound on x; casting x/w1 to bf16 (keeping f32 MXU
    # accumulation) would ~halve traffic but changes numerics, so it is left to
    # the caller. Resident weight specs could also use pipeline_mode=pl.Buffered(1)
    # to skip double-buffering (minor VMEM saving, already within budget).
    # TODO(synk): if D (the contraction dim) ever gets large enough to blow VMEM,
    # add a trailing "arbitrary" K grid axis with an f32 accumulator scratch.
    out = pl.pallas_call(
        _mlp_kernel,
        out_shape=jax.ShapeDtypeStruct((1, Bout), x.dtype),
        grid=grid,
        in_specs=[
            pl.BlockSpec((TB, D), lambda i: (i, 0)),             # x: streamed per batch tile
            pl.BlockSpec((D, H), lambda i: (0, 0)),              # w1: resident across tiles
            pl.BlockSpec((1, H), lambda i: (0, 0)),              # b1 row: resident
            pl.BlockSpec((1, H), lambda i: (0, 0)),              # w2 row: resident
            pl.BlockSpec(memory_space=pltpu.MemorySpace.SMEM),   # b2: scalar in SMEM
        ],
        out_specs=pl.BlockSpec((1, TB), lambda i: (0, i)),       # lane-dense output
        compiler_params=pltpu.CompilerParams(
            dimension_semantics=("parallel",),                   # shard batch over TCs (v7x)
            vmem_limit_bytes=_VMEM_BUDGET,                       # explicit (v5e default is 16 MiB)
        ),
        cost_estimate=cost,
    )(x, w1, b1_row, w2_row, b2_vec)

    return out[0, :B].reshape(B, 1)


def init_params(key, input_dim, hidden_dim=128, output_dim=1, dtype=jnp.float32):
    """Deterministic init mimicking nn.Linear's U(-1/sqrt(fan_in), 1/sqrt(fan_in))."""
    k1, k2, k3, k4 = jax.random.split(key, 4)
    lim1 = 1.0 / jnp.sqrt(jnp.array(input_dim, dtype))
    lim2 = 1.0 / jnp.sqrt(jnp.array(hidden_dim, dtype))
    w1 = jax.random.uniform(k1, (input_dim, hidden_dim), dtype, -lim1, lim1)
    b1 = jax.random.uniform(k2, (hidden_dim,), dtype, -lim1, lim1)
    w2 = jax.random.uniform(k3, (hidden_dim, output_dim), dtype, -lim2, lim2)
    b2 = jax.random.uniform(k4, (output_dim,), dtype, -lim2, lim2)
    return w1, b1, w2, b2


if __name__ == "__main__":
    key = jax.random.PRNGKey(0)
    kx, kp = jax.random.split(key)

    batch = 8
    input_dim = 32   # stands in for X_train.shape[1]
    output_dim = 1

    x = jax.random.normal(kx, (batch, input_dim), jnp.float32)
    w1, b1, w2, b2 = init_params(kp, input_dim, 128, output_dim)

    out = student_model_forward(x, w1, b1, w2, b2)
    out = jax.block_until_ready(out)

    # Pure-JAX reference check of the same forward pass.
    ref = jnp.maximum(x @ w1 + b1, 0.0) @ w2 + b2
    assert out.shape == (batch, output_dim)
    assert jnp.allclose(out, ref, atol=1e-5, rtol=1e-5)

    print("KERNEL_OK")
</pallas_src>

<mosaic_0001>
module attributes {stable_mosaic.version = 11 : i64} {
  func.func @_mlp_kernel(%arg0: i32, %arg1: memref<128x32xf32, #tpu.memory_space<vmem>>, %arg2: memref<32x128xf32, #tpu.memory_space<vmem>>, %arg3: memref<1x128xf32, #tpu.memory_space<vmem>>, %arg4: memref<1x128xf32, #tpu.memory_space<vmem>>, %arg5: memref<1xf32, #tpu.memory_space<smem>>, %arg6: memref<1x128xf32, #tpu.memory_space<vmem>>) attributes {dimension_semantics = [#tpu.dimension_semantics<parallel>], iteration_bounds = array<i64: 1>, scalar_prefetch = 0 : i64, scratch_operands = 0 : i64, tpu.core_type = #tpu.core_type<tc>, window_params = [{transform_indices = @transform_0, window_bounds = array<i64: 128, 32>}, {pipeline_mode = #tpu.pipeline_mode<synchronous>, transform_indices = @transform_1, window_bounds = array<i64: 32, 128>}, {pipeline_mode = #tpu.pipeline_mode<synchronous>, transform_indices = @transform_2, window_bounds = array<i64: 1, 128>}, {pipeline_mode = #tpu.pipeline_mode<synchronous>, transform_indices = @transform_3, window_bounds = array<i64: 1, 128>}, {transform_indices = @transform_4, window_bounds = array<i64: 1>}, {transform_indices = @transform_5, window_bounds = array<i64: 1, 128>}]} {
    %c0 = arith.constant 0 : index
    %c0_0 = arith.constant 0 : index
    %0 = vector.load %arg1[%c0, %c0_0] : memref<128x32xf32, #tpu.memory_space<vmem>>, vector<128x32xf32>
    %c0_1 = arith.constant 0 : index
    %c0_2 = arith.constant 0 : index
    %1 = vector.load %arg2[%c0_1, %c0_2] : memref<32x128xf32, #tpu.memory_space<vmem>>, vector<32x128xf32>
    %cst = arith.constant dense<0.000000e+00> : vector<128x128xf32>
    %2 = tpu.matmul %0, %1, %cst {dimension_numbers = #tpu.dot_dimension_numbers<[1], [0], [0], [1], [0, 0, 1, 1], [], []>} : vector<128x32xf32>, vector<32x128xf32>, vector<128x128xf32> -> vector<128x128xf32>
    %c0_3 = arith.constant 0 : index
    %c0_4 = arith.constant 0 : index
    %3 = vector.load %arg3[%c0_3, %c0_4] : memref<1x128xf32, #tpu.memory_space<vmem>>, vector<1x128xf32>
    %4 = vector.broadcast %3 : vector<1x128xf32> to vector<128x128xf32>
    %5 = arith.addf %2, %4 : vector<128x128xf32>
    %cst_5 = arith.constant 0.000000e+00 : f32
    %6 = vector.broadcast %cst_5 : f32 to vector<128x128xf32>
    %7 = arith.maximumf %5, %6 : vector<128x128xf32>
    %c0_6 = arith.constant 0 : index
    %c0_7 = arith.constant 0 : index
    %8 = vector.load %arg4[%c0_6, %c0_7] : memref<1x128xf32, #tpu.memory_space<vmem>>, vector<1x128xf32>
    %9 = vector.broadcast %8 : vector<1x128xf32> to vector<128x128xf32>
    %10 = arith.mulf %7, %9 : vector<128x128xf32>
    %cst_8 = arith.constant dense<0.000000e+00> : vector<128xf32>
    %11 = vector.multi_reduction <add>, %10, %cst_8 [1] : vector<128x128xf32> to vector<128xf32>
    %c0_9 = arith.constant 0 : index
    %12 = memref.load %arg5[%c0_9] : memref<1xf32, #tpu.memory_space<smem>>
    %13 = vector.broadcast %12 : f32 to vector<128xf32>
    %14 = arith.addf %11, %13 : vector<128xf32>
    %15 = vector.shape_cast %14 : vector<128xf32> to vector<1x128xf32>
    %c0_10 = arith.constant 0 : index
    %c0_11 = arith.constant 0 : index
    %16 = vector.load %arg6[%c0_10, %c0_11] : memref<1x128xf32, #tpu.memory_space<vmem>>, vector<1x128xf32>
    tpu.vector_store %arg6[%c0_10, %c0_11], %15 {strides = array<i32>} : memref<1x128xf32, #tpu.memory_space<vmem>>, vector<1x128xf32>,
    return
  }
  func.func @transform_0(%arg0: i32) -> (i32, i32) {
    %c0_i32 = arith.constant 0 : i32
    %c0_i32_0 = arith.constant 0 : i32
    return %arg0, %c0_i32 : i32, i32
  }
  func.func @transform_1(%arg0: i32) -> (i32, i32) {
    %c0_i32 = arith.constant 0 : i32
    %c0_i32_0 = arith.constant 0 : i32
    %c0_i32_1 = arith.constant 0 : i32
    return %c0_i32, %c0_i32_0 : i32, i32
  }
  func.func @transform_2(%arg0: i32) -> (i32, i32) {
    %c0_i32 = arith.constant 0 : i32
    %c0_i32_0 = arith.constant 0 : i32
    %c0_i32_1 = arith.constant 0 : i32
    return %c0_i32, %c0_i32_0 : i32, i32
  }
  func.func @transform_3(%arg0: i32) -> (i32, i32) {
    %c0_i32 = arith.constant 0 : i32
    %c0_i32_0 = arith.constant 0 : i32
    %c0_i32_1 = arith.constant 0 : i32
    return %c0_i32, %c0_i32_0 : i32, i32
  }
  func.func @transform_4(%arg0: i32) -> i32 {
    %c0_i32 = arith.constant 0 : i32
    %c0_i32_0 = arith.constant 0 : i32
    return %c0_i32 : i32
  }
  func.func @transform_5(%arg0: i32) -> (i32, i32) {
    %c0_i32 = arith.constant 0 : i32
    %c0_i32_0 = arith.constant 0 : i32
    return %c0_i32, %arg0 : i32, i32
  }
}

</mosaic_0001>

<llo_original>
// kernel: tpu_custom_call.1
$region0: #{tpu_custom_call.1}
  #allocation0 [shape = 'u32[]', space=smem, size = 0x4, offset = 0x4, fixed_abs, tag = 'smem constant byte address 0x4 - core index']
  #allocation1 [shape = 'u32[72,128]{1,0:T(1,128)}', space=vmem, size = 0x9000, scoped, tag = 'internal scratch']
  #allocation2 [shape = 'f32[1]{0:T(128)S(6)}', space=smem, size = 0x200, scoped, tag = 'scoped memory for tpu_custom_call.1']
  %s0 = inlined_call_operand.hbm [shape: f32[8,32], index: 0, kind: input, shape index: {}]
  %s1 = inlined_call_operand.hbm [shape: f32[32,128], index: 1, kind: input, shape index: {}]
  %s2 = inlined_call_operand.vmem [shape: f32[1,128], index: 2, kind: input, shape index: {}]
  %s3 = inlined_call_operand.vmem [shape: f32[1,128], index: 3, kind: input, shape index: {}]
  %s4 = inlined_call_operand.<no memory space> [shape: f32[1], index: 4, kind: input, shape index: {}]
  %s5 = inlined_call_operand.hbm [shape: f32[1,128], index: 5, kind: output, shape index: {}]
  %s6 = sld [smem:[#allocation0]]
  $region38: #{tpu_custom_call.1} parent=0
    _
  %s8 = ssub.s32 1, %s6
  %s9 = scalar_select 0, %s8, %s6
  %10 = sst [smem:[#allocation2]] %s4
  $region1: #{tpu_custom_call.1} parent=0
    #allocation3 [shape = 'u8[65536]{0}', space=vmem, size = 0x10000, scoped, tag = 'input window, operand 0, single buffered']
    #allocation4 [shape = 's32[1]{0}', space=sflag, size = 0x4, scoped, tag = 'scoped memory for tpu_custom_call.1']
    #allocation5 [shape = 's32[1]{0}', space=sflag, size = 0x4, scoped, tag = 'scoped memory for tpu_custom_call.1']
    #allocation6 [shape = 'u8[16384]{0}', space=vmem, size = 0x4000, scoped, tag = 'input window, operand 1, single buffered']
    #allocation7 [shape = 's32[1]{0}', space=sflag, size = 0x4, scoped, tag = 'scoped memory for tpu_custom_call.1']
    #allocation8 [shape = 'u8[512]{0}', space=vmem, size = 0x400, scoped, tag = 'output window, operand 0, single buffered']
    %11 = vsyncpa [#allocation4], 0
    %12 = vsyncpa [#allocation7], 0
    %13 = vsyncpa [#allocation5], 0
    // Predicated region
    $region2: #{tpu_custom_call.1} parent=1 // pred_check
      _
    $region3: #{tpu_custom_call.1} parent=1 // pred_check_branch
      %15 = sbr.rel (0) target = $region5
    $region4: #{tpu_custom_call.1} parent=1 // pred_region
      %17 = vsyncadd [#allocation4], 1920
      %s18 = sshll.u32 %s0, 4
      %s19 = int_to_ptr.hbm [resolvable:$true] %s18
      %s20 = sshll.u32 [#allocation3], 4
      %s21 = int_to_ptr.vmem [resolvable:$true] %s20
      %26 = dma.hbm_to_vmem [thread:$0]  %s19, 128, %s21, [#allocation4], 128, 128, 8
    $region5: #{tpu_custom_call.1} parent=1 // pred_fallthru
      _
    // Predicated region
    $region6: #{tpu_custom_call.1} parent=1 // pred_check
      _
    $region7: #{tpu_custom_call.1} parent=1 // pred_check_branch
      %28 = sbr.rel (0) target = $region9
    $region8: #{tpu_custom_call.1} parent=1 // pred_region
      %30 = vsyncadd [#allocation7], 0
      %s31 = sshll.u32 %s1, 4
      %s32 = int_to_ptr.hbm [resolvable:$true] %s31
      %s33 = sshll.u32 [#allocation6], 4
      %s34 = int_to_ptr.vmem [resolvable:$true] %s33
      %39 = dma.hbm_to_vmem [thread:$0]  %s32, 512, %s34, [#allocation7], 128, 128, 8
    $region9: #{tpu_custom_call.1} parent=1 // pred_fallthru
      _
    // Predicated region
    $region10: #{tpu_custom_call.1} parent=1 // pred_check
      _
    $region11: #{tpu_custom_call.1} parent=1 // pred_check_branch
      %41 = sbr.rel (0) target = $region13
    $region12: #{tpu_custom_call.1} parent=1 // pred_region
      _
    $region13: #{tpu_custom_call.1} parent=1 // pred_fallthru
      _
    // Predicated region
    $region14: #{tpu_custom_call.1} parent=1 // pred_check
      _
    $region15: #{tpu_custom_call.1} parent=1 // pred_check_branch
      %43 = sbr.rel (0) target = $region17
    $region16: #{tpu_custom_call.1} parent=1 // pred_region
      _
    $region17: #{tpu_custom_call.1} parent=1 // pred_fallthru
      _
    // Predicated region
    $region18: #{tpu_custom_call.1} parent=1 // pred_check
      _
    $region19: #{tpu_custom_call.1} parent=1 // pred_check_branch
      %45 = sbr.rel (0) target = $region21
    $region20: #{tpu_custom_call.1} parent=1 // pred_region
      _
    $region21: #{tpu_custom_call.1} parent=1 // pred_fallthru
      _
    // Predicated region
    $region22: #{tpu_custom_call.1} parent=1 // pred_check
      _
    $region23: #{tpu_custom_call.1} parent=1 // pred_check_branch
      %47 = sbr.rel (0) target = $region25
    $region24: #{tpu_custom_call.1} parent=1 // pred_region
      %49 = dma.done [#allocation4], 2048
    $region25: #{tpu_custom_call.1} parent=1 // pred_fallthru
      _
    // Predicated region
    $region26: #{tpu_custom_call.1} parent=1 // pred_check
      _
    $region27: #{tpu_custom_call.1} parent=1 // pred_check_branch
      %51 = sbr.rel (0) target = $region29
    $region28: #{tpu_custom_call.1} parent=1 // pred_region
      %53 = dma.done [#allocation7], 512
    $region29: #{tpu_custom_call.1} parent=1 // pred_fallthru
      _
    %v54 = vld [vmem:[#allocation3] sm:$0xff]
    %v55 = vld [vmem:[#allocation3 + $0x8] sm:$0xff]
    %v56 = vld [vmem:[#allocation3 + $0x10] sm:$0xff]
    %v57 = vld [vmem:[#allocation3 + $0x18] sm:$0xff]
    %v58 = vld [vmem:[#allocation3 + $0x20] sm:$0xff]
    %v59 = vld [vmem:[#allocation3 + $0x28] sm:$0xff]
    %v60 = vld [vmem:[#allocation3 + $0x30] sm:$0xff]
    %v61 = vld [vmem:[#allocation3 + $0x38] sm:$0xff]
    %v62 = vld [vmem:[#allocation3 + $0x40] sm:$0xff]
    %v63 = vld [vmem:[#allocation3 + $0x48] sm:$0xff]
    %v64 = vld [vmem:[#allocation3 + $0x50] sm:$0xff]
    %v65 = vld [vmem:[#allocation3 + $0x58] sm:$0xff]
    %v66 = vld [vmem:[#allocation3 + $0x60] sm:$0xff]
    %v67 = vld [vmem:[#allocation3 + $0x68] sm:$0xff]
    %v68 = vld [vmem:[#allocation3 + $0x70] sm:$0xff]
    %v69 = vld [vmem:[#allocation3 + $0x78] sm:$0xff]
    %v70 = vld [vmem:[#allocation6] sm:$0xff]
    %v71 = vld [vmem:[#allocation6 + $0x8] sm:$0xff]
    %v72 = vld [vmem:[#allocation6 + $0x10] sm:$0xff]
    %v73 = vld [vmem:[#allocation6 + $0x18] sm:$0xff]
    %v74 = vld [vmem:[%s2] sm:$0x1]
    %v76 = vperm.slane %v74, 0
    %vm78 = vcmask 261120
    %v80 = vsel %vm78, %v54, 0
    %v83 = vsel %vm78, %v55, 0
    %v86 = vsel %vm78, %v56, 0
    %v89 = vsel %vm78, %v57, 0
    %v92 = vsel %vm78, %v58, 0
    %v95 = vsel %vm78, %v59, 0
    %v98 = vsel %vm78, %v60, 0
    %v101 = vsel %vm78, %v61, 0
    %v104 = vsel %vm78, %v62, 0
    %v107 = vsel %vm78, %v63, 0
    %v110 = vsel %vm78, %v64, 0
    %v113 = vsel %vm78, %v65, 0
    %v116 = vsel %vm78, %v66, 0
    %v119 = vsel %vm78, %v67, 0
    %v122 = vsel %vm78, %v68, 0
    %v125 = vsel %vm78, %v69, 0
    %127 = vmatpush.msra.mxu0 0.0
    %128 = vmatpush.msra.mxu0 0.0
    %129 = vmatpush.msra.mxu0 0.0
    %130 = vmatpush.msra.mxu0 0.0
    %131 = vmatpush.msra.mxu0 0.0
    %132 = vmatpush.msra.mxu0 0.0
    %133 = vmatpush.msra.mxu0 0.0
    %134 = vmatpush.msra.mxu0 0.0
    %135 = vmatpush.msra.mxu0 0.0
    %136 = vmatpush.msra.mxu0 0.0
    %137 = vmatpush.msra.mxu0 0.0
    %138 = vmatpush.msra.mxu0 0.0
    %139 = vmatpush.msra.mxu0 %v73
    %140 = vmatpush.msra.mxu0 %v72
    %141 = vmatpush.msra.mxu0 %v71
    %142 = vmatpush.msra.mxu0 %v70
    %143 = vmatmul.f32.gmra.mxu0 %v80
    %v144 = vpop.f32.mrf.mxu0
    %v145 = vadd.f32 %v76, %v144
    %146 = vmatmul.f32.gmra.mxu0 %v83
    %v147 = vpop.f32.mrf.mxu0
    %v148 = vadd.f32 %v76, %v147
    %149 = vmatmul.f32.gmra.mxu0 %v86
    %v150 = vpop.f32.mrf.mxu0
    %v151 = vadd.f32 %v76, %v150
    %152 = vmatmul.f32.gmra.mxu0 %v89
    %v153 = vpop.f32.mrf.mxu0
    %v154 = vadd.f32 %v76, %v153
    %155 = vmatmul.f32.gmra.mxu0 %v92
    %v156 = vpop.f32.mrf.mxu0
    %v157 = vadd.f32 %v76, %v156
    %158 = vmatmul.f32.gmra.mxu0 %v95
    %v159 = vpop.f32.mrf.mxu0
    %v160 = vadd.f32 %v76, %v159
    %161 = vmatmul.f32.gmra.mxu0 %v98
    %v162 = vpop.f32.mrf.mxu0
    %v163 = vadd.f32 %v76, %v162
    %164 = vmatmul.f32.gmra.mxu0 %v101
    %v165 = vpop.f32.mrf.mxu0
    %v166 = vadd.f32 %v76, %v165
    %167 = vmatmul.f32.gmra.mxu0 %v104
    %v168 = vpop.f32.mrf.mxu0
    %v169 = vadd.f32 %v76, %v168
    %170 = vmatmul.f32.gmra.mxu0 %v107
    %v171 = vpop.f32.mrf.mxu0
    %v172 = vadd.f32 %v76, %v171
    %173 = vmatmul.f32.gmra.mxu0 %v110
    %v174 = vpop.f32.mrf.mxu0
    %v175 = vadd.f32 %v76, %v174
    %176 = vmatmul.f32.gmra.mxu0 %v113
    %v177 = vpop.f32.mrf.mxu0
    %v178 = vadd.f32 %v76, %v177
    %179 = vmatmul.f32.gmra.mxu0 %v116
    %v180 = vpop.f32.mrf.mxu0
    %v181 = vadd.f32 %v76, %v180
    %182 = vmatmul.f32.gmra.mxu0 %v119
    %v183 = vpop.f32.mrf.mxu0
    %v184 = vadd.f32 %v76, %v183
    %185 = vmatmul.f32.gmra.mxu0 %v122
    %v186 = vpop.f32.mrf.mxu0
    %v187 = vadd.f32 %v76, %v186
    %188 = vmatmul.f32.gmra.mxu0 %v125
    %v189 = vpop.f32.mrf.mxu0
    %v190 = vadd.f32 %v76, %v189
    %191 = vdwg.mxu0
    %v192 = vmax.f32 %v145, 0.0
    %v193 = vmax.f32 %v148, 0.0
    %v194 = vmax.f32 %v151, 0.0
    %v195 = vmax.f32 %v154, 0.0
    %v196 = vmax.f32 %v157, 0.0
    %v197 = vmax.f32 %v160, 0.0
    %v198 = vmax.f32 %v163, 0.0
    %v199 = vmax.f32 %v166, 0.0
    %v200 = vmax.f32 %v169, 0.0
    %v201 = vmax.f32 %v172, 0.0
    %v202 = vmax.f32 %v175, 0.0
    %v203 = vmax.f32 %v178, 0.0
    %v204 = vmax.f32 %v181, 0.0
    %v205 = vmax.f32 %v184, 0.0
    %v206 = vmax.f32 %v187, 0.0
    %v207 = vmax.f32 %v190, 0.0
    %v208 = vld [vmem:[%s3] sm:$0x1]
    %v210 = vperm.slane %v208, 0
    %v212 = vmul.f32 %v192, %v210
    %v213 = vmul.f32 %v193, %v210
    %v214 = vmul.f32 %v194, %v210
    %v215 = vmul.f32 %v195, %v210
    %v216 = vmul.f32 %v196, %v210
    %v217 = vmul.f32 %v197, %v210
    %v218 = vmul.f32 %v198, %v210
    %v219 = vmul.f32 %v199, %v210
    %v220 = vmul.f32 %v200, %v210
    %v221 = vmul.f32 %v201, %v210
    %v222 = vmul.f32 %v202, %v210
    %v223 = vmul.f32 %v203, %v210
    %v224 = vmul.f32 %v204, %v210
    %v225 = vmul.f32 %v205, %v210
    %v226 = vmul.f32 %v206, %v210
    %v227 = vmul.f32 %v207, %v210
    %228 = vadd.xlane.f32.xlu0 %v212
    %v229 = vpop.xlane.xlu0 %228
    %230 = vadd.xlane.f32.xlu0 %v213
    %v231 = vpop.xlane.xlu0 %230
    %232 = vadd.xlane.f32.xlu0 %v214
    %v233 = vpop.xlane.xlu0 %232
    %234 = vadd.xlane.f32.xlu0 %v215
    %v235 = vpop.xlane.xlu0 %234
    %236 = vadd.xlane.f32.xlu0 %v216
    %v237 = vpop.xlane.xlu0 %236
    %238 = vadd.xlane.f32.xlu0 %v217
    %v239 = vpop.xlane.xlu0 %238
    %240 = vadd.xlane.f32.xlu0 %v218
    %v241 = vpop.xlane.xlu0 %240
    %242 = vadd.xlane.f32.xlu0 %v219
    %v243 = vpop.xlane.xlu0 %242
    %244 = vadd.xlane.f32.xlu0 %v220
    %v245 = vpop.xlane.xlu0 %244
    %246 = vadd.xlane.f32.xlu0 %v221
    %v247 = vpop.xlane.xlu0 %246
    %248 = vadd.xlane.f32.xlu0 %v222
    %v249 = vpop.xlane.xlu0 %248
    %250 = vadd.xlane.f32.xlu0 %v223
    %v251 = vpop.xlane.xlu0 %250
    %252 = vadd.xlane.f32.xlu0 %v224
    %v253 = vpop.xlane.xlu0 %252
    %254 = vadd.xlane.f32.xlu0 %v225
    %v255 = vpop.xlane.xlu0 %254
    %256 = vadd.xlane.f32.xlu0 %v226
    %v257 = vpop.xlane.xlu0 %256
    %258 = vadd.xlane.f32.xlu0 %v227
    %v259 = vpop.xlane.xlu0 %258
    %s260 = sld [smem:[#allocation2]]
    %v261 = vstv %s260
    %v262 = vadd.f32 %v229, %v261
    %v263 = vadd.f32 %v231, %v261
    %v264 = vadd.f32 %v233, %v261
    %v265 = vadd.f32 %v235, %v261
    %v266 = vadd.f32 %v237, %v261
    %v267 = vadd.f32 %v239, %v261
    %v268 = vadd.f32 %v241, %v261
    %v269 = vadd.f32 %v243, %v261
    %v270 = vadd.f32 %v245, %v261
    %v271 = vadd.f32 %v247, %v261
    %v272 = vadd.f32 %v249, %v261
    %v273 = vadd.f32 %v251, %v261
    %v274 = vadd.f32 %v253, %v261
    %v275 = vadd.f32 %v255, %v261
    %v276 = vadd.f32 %v257, %v261
    %v277 = vadd.f32 %v259, %v261
    %v294 = vlaneseq
    %v295 = vand.u32 %v294, 127
    %v296 = vperm.slane %v262, %v295
    %v297 = vadd.s32 %v295, 4294967288
    %v298 = vperm.slane %v263, %v297
    %vm299 = vcmask 130112
    %v300 = vsel %vm299, %v298, %v296
    %v301 = vadd.s32 %v295, 4294967280
    %v302 = vperm.slane %v264, %v301
    %vm303 = vcmask 195712
    %v304 = vsel %vm303, %v302, %v300
    %v305 = vadd.s32 %v295, 4294967272
    %v306 = vperm.slane %v265, %v305
    %vm307 = vcmask 261312
    %v308 = vsel %vm307, %v306, %v304
    %v309 = vadd.s32 %v295, 4294967264
    %v310 = vperm.slane %v266, %v309
    %vm311 = vcmask 326912
    %v312 = vsel %vm311, %v310, %v308
    %v313 = vadd.s32 %v295, 4294967256
    %v314 = vperm.slane %v267, %v313
    %vm315 = vcmask 392512
    %v316 = vsel %vm315, %v314, %v312
    %v317 = vadd.s32 %v295, 4294967248
    %v318 = vperm.slane %v268, %v317
    %vm319 = vcmask 458112
    %v320 = vsel %vm319, %v318, %v316
    %v321 = vadd.s32 %v295, 4294967240
    %v322 = vperm.slane %v269, %v321
    %vm323 = vcmask 523712
    %v324 = vsel %vm323, %v322, %v320
    %v325 = vadd.s32 %v295, 4294967232
    %v326 = vperm.slane %v270, %v325
    %vm327 = vcmask 589312
    %v328 = vsel %vm327, %v326, %v324
    %v329 = vadd.s32 %v295, 4294967224
    %v330 = vperm.slane %v271, %v329
    %vm331 = vcmask 654912
    %v332 = vsel %vm331, %v330, %v328
    %v333 = vadd.s32 %v295, 4294967216
    %v334 = vperm.slane %v272, %v333
    %vm335 = vcmask 720512
    %v336 = vsel %vm335, %v334, %v332
    %v337 = vadd.s32 %v295, 4294967208
    %v338 = vperm.slane %v273, %v337
    %vm339 = vcmask 786112
    %v340 = vsel %vm339, %v338, %v336
    %v341 = vadd.s32 %v295, 4294967200
    %v342 = vperm.slane %v274, %v341
    %vm343 = vcmask 851712
    %v344 = vsel %vm343, %v342, %v340
    %v345 = vadd.s32 %v295, 4294967192
    %v346 = vperm.slane %v275, %v345
    %vm347 = vcmask 917312
    %v348 = vsel %vm347, %v346, %v344
    %v349 = vadd.s32 %v295, 4294967184
    %v350 = vperm.slane %v276, %v349
    %vm351 = vcmask 982912
    %v352 = vsel %vm351, %v350, %v348
    %v353 = vadd.s32 %v295, 4294967176
    %v354 = vperm.slane %v277, %v353
    %vm355 = vcmask 1048512
    %v356 = vsel %vm355, %v354, %v352
    %358 = vst [vmem:[#allocation8] sm:$0x1] %v356
    // Predicated region
    $region30: #{tpu_custom_call.1} parent=1 // pred_check
      _
    $region31: #{tpu_custom_call.1} parent=1 // pred_check_branch
      %360 = sbr.rel (0) target = $region33
    $region32: #{tpu_custom_call.1} parent=1 // pred_region
      %362 = vsyncadd [#allocation5], 0
      %s364 = sshll.u32 [#allocation8], 4
      %s365 = int_to_ptr.vmem [resolvable:$true] %s364
      %s366 = sshll.u32 %s5, 4
      %s367 = int_to_ptr.hbm [resolvable:$true] %s366
      %369 = dma.vmem_to_hbm [thread:$0]  %s365, 16, %s367, [#allocation5]
    $region33: #{tpu_custom_call.1} parent=1 // pred_fallthru
      _
    // Predicated region
    $region34: #{tpu_custom_call.1} parent=1 // pred_check
      _
    $region35: #{tpu_custom_call.1} parent=1 // pred_check_branch
      %371 = sbr.rel (0) target = $region37
    $region36: #{tpu_custom_call.1} parent=1 // pred_region
      %373 = dma.done [#allocation5], 16
    $region37: #{tpu_custom_call.1} parent=1 // pred_fallthru
      _
    %374 = vsyncpa [#allocation4], 1
    %375 = vsyncpa [#allocation7], 1
    %376 = vsyncpa [#allocation5], 1

</llo_original>
